<compile_context>
chip_gen: v7x
topology: tpu7x:2x2x1
jax: 0.10.0
libtpu: 0.0.40
codegen_flags: <defaults>
</compile_context>

<pallas_src>
import functools

import jax
import jax.numpy as jnp
import numpy as np
from jax.experimental import pallas as pl
from jax.experimental.pallas import tpu as pltpu


def _se_kernel(x_ref, w1t_ref, w2t_ref, o_ref, *, inv_hw):
    # x_ref: (TB, C, HW) native dtype; w1t_ref: (C, hidden); w2t_ref: (hidden, C)

    # 1) squeeze: global average pool (f32 accumulation).  Read the block here
    #    and again at the store below: two streamed traversals keep vreg
    #    pressure flat instead of holding the multi-MiB block live across the
    #    matmul/sigmoid chain.
    pooled = jnp.sum(x_ref[...], axis=-1, dtype=jnp.float32) * inv_hw   # (TB, C)

    # 2) excitation MLP: Linear(C -> hidden, no bias) + ReLU
    h = jnp.maximum(
        jnp.dot(pooled, w1t_ref[...], preferred_element_type=jnp.float32), 0.0)

    #    Linear(hidden -> C, no bias) + Sigmoid
    g = jax.nn.sigmoid(
        jnp.dot(h, w2t_ref[...], preferred_element_type=jnp.float32))   # (TB, C)

    # 3) scale: native-dtype multiply, per-channel gate broadcast over spatial.
    o_ref[...] = x_ref[...] * g.astype(o_ref.dtype)[:, :, None]


def _vmem_capacity_bytes():
    """Physical VMEM per TensorCore; conservative fallback = 64 MiB (v7x)."""
    try:
        return int(pltpu.get_tpu_info().vmem_capacity_bytes)
    except Exception:
        return 64 * 1024 * 1024


def _num_tensorcores():
    """TensorCores per chip that megacore 'parallel' shards across."""
    try:
        kind = str(jax.devices()[0].device_kind).lower()
    except Exception:
        return 1
    return 2 if ("v7" in kind or "7x" in kind) else 1


def se_layer(x, w1, w2):
    """x: (B, C, H, W) NCHW; w1: (C//r, C); w2: (C, C//r) (PyTorch Linear layouts)."""
    B, C, H, W = x.shape
    HW = H * W
    hidden = w1.shape[0]
    assert w1.shape == (hidden, C) and w2.shape == (C, hidden)

    itemsize = jnp.dtype(x.dtype).itemsize
    w_itemsize = jnp.dtype(w1.dtype).itemsize

    # --- batch-tile selection (no padding: TB must divide B) -----------------
    vmem_cap = _vmem_capacity_bytes()
    ncores = _num_tensorcores()
    # ~4 MiB blocks on v7x (64 MiB VMEM), ~8 MiB on v5e/v6e (128 MiB).
    block_budget = max(1, vmem_cap // 16)
    bytes_per_row = C * HW * itemsize

    divisors = [d for d in range(1, B + 1)
                if B % d == 0 and d * bytes_per_row <= block_budget]
    if not divisors:
        # Single batch row per step already exceeds the soft budget: fall back
        # to TB=1 and raise the VMEM limit below.
        # TODO(synk): for truly huge rows (C*HW*itemsize approaching VMEM),
        # split the spatial axis with an inner pltpu.emit_pipeline (f32 pooled
        # accumulator, then a second spatial loop for the scale).
        divisors = [1]
    if ncores > 1:
        balanced = [d for d in divisors if (B // d) % ncores == 0]
        TB = max(balanced) if balanced else max(divisors)
    else:
        TB = max(divisors)
    grid = (B // TB,)

    x_flat = x.reshape(B, C, HW)          # free view, no pad, no copy

    # Pre-transpose weights once in the wrapper: kernel computes
    # (TB,C)@(C,hidden) and (TB,hidden)@(hidden,C) with no in-kernel transpose.
    w1t = w1.T                            # (C, hidden)
    w2t = w2.T                            # (hidden, C)

    kernel = functools.partial(_se_kernel, inv_hw=float(1.0 / HW))

    # VMEM budget: double-buffered x-in + x-out blocks, resident weights, slack.
    w_bytes = 2 * C * hidden * w_itemsize
    vmem_needed = 4 * TB * bytes_per_row + w_bytes + (2 << 20)
    vmem_limit = min(int(vmem_cap * 3 // 4), max(vmem_cap // 2, vmem_needed))

    # Advisory cost: pure HBM bandwidth (read x once, write once).
    cost = pl.CostEstimate(
        flops=int(2 * B * C * HW + 4 * B * C * hidden),   # pool adds + 2 matmuls + scale
        transcendentals=int(B * C),
        bytes_accessed=int(2 * B * C * HW * itemsize + w_bytes),
    )

    out_flat = pl.pallas_call(
        kernel,
        out_shape=jax.ShapeDtypeStruct((B, C, HW), x.dtype),
        grid_spec=pltpu.PrefetchScalarGridSpec(
            num_scalar_prefetch=0,
            grid=grid,
            in_specs=[
                pl.BlockSpec((TB, C, HW), lambda b: (b, 0, 0)),
                pl.BlockSpec((C, hidden), lambda b: (0, 0)),
                pl.BlockSpec((hidden, C), lambda b: (0, 0)),
            ],
            out_specs=pl.BlockSpec((TB, C, HW), lambda b: (b, 0, 0)),
        ),
        compiler_params=pltpu.CompilerParams(
            dimension_semantics=("parallel",),
            vmem_limit_bytes=int(vmem_limit),
        ),
        cost_estimate=cost,
    )(x_flat, w1t, w2t)

    return out_flat.reshape(B, C, H, W)


def se_layer_ref(x, w1, w2):
    """Pure-JAX reference matching SELayer.forward."""
    y = jnp.mean(x, axis=(2, 3))                     # (B, C)
    y = jnp.maximum(y @ w1.T, 0.0)                   # (B, hidden)
    y = jax.nn.sigmoid(y @ w2.T)                     # (B, C)
    return x * y[:, :, None, None]


# TODO(synk): the ResNet backbone (conv1/bn1/maxpool/layer1..4/avgpool), the
# optional NONLocalBlock2D, and the CrossNorm statistics-transfer path are
# standard conv/norm/XLA ops; only the SELayer gate is a fused Pallas kernel.


if __name__ == "__main__":
    # Small shapes consistent with the module: SELayer(channel=64, reduction=16)
    # -> hidden=4, applied to a layer4-style 7x7 feature map (HW=49 exercises
    # the full-extent, non-128-multiple spatial block path).
    B, C, H, W = 2, 64, 7, 7
    reduction = 16
    hidden = C // reduction

    key = jax.random.PRNGKey(0)
    kx, k1, k2 = jax.random.split(key, 3)

    x = jax.random.normal(kx, (B, C, H, W), dtype=jnp.float32)
    # Deterministic synthetic weights (PyTorch nn.Linear weight shapes, no bias).
    w1 = jax.random.normal(k1, (hidden, C), dtype=jnp.float32) * 0.1   # Linear(C, C//r)
    w2 = jax.random.normal(k2, (C, hidden), dtype=jnp.float32) * 0.1   # Linear(C//r, C)

    out = se_layer(x, w1, w2)
    out = jax.block_until_ready(out)

    ref = se_layer_ref(x, w1, w2)
    np.testing.assert_allclose(np.asarray(out), np.asarray(ref), rtol=1e-5, atol=1e-5)

    print("KERNEL_OK")
</pallas_src>

<mosaic_0001>
module attributes {stable_mosaic.version = 11 : i64} {
  func.func @_se_kernel(%arg0: i32, %arg1: memref<2x64x49xf32, #tpu.memory_space<vmem>>, %arg2: memref<64x4xf32, #tpu.memory_space<vmem>>, %arg3: memref<4x64xf32, #tpu.memory_space<vmem>>, %arg4: memref<2x64x49xf32, #tpu.memory_space<vmem>>) attributes {dimension_semantics = [#tpu.dimension_semantics<parallel>], iteration_bounds = array<i64: 1>, scalar_prefetch = 0 : i64, scratch_operands = 0 : i64, tpu.core_type = #tpu.core_type<tc>, window_params = [{transform_indices = @transform_0, window_bounds = array<i64: 2, 64, 49>}, {pipeline_mode = #tpu.pipeline_mode<synchronous>, transform_indices = @transform_1, window_bounds = array<i64: 64, 4>}, {pipeline_mode = #tpu.pipeline_mode<synchronous>, transform_indices = @transform_2, window_bounds = array<i64: 4, 64>}, {transform_indices = @transform_3, window_bounds = array<i64: 2, 64, 49>}]} {
    %c0 = arith.constant 0 : index
    %c0_0 = arith.constant 0 : index
    %c0_1 = arith.constant 0 : index
    %0 = vector.load %arg1[%c0, %c0_0, %c0_1] : memref<2x64x49xf32, #tpu.memory_space<vmem>>, vector<2x64x49xf32>
    %cst = arith.constant dense<0.000000e+00> : vector<2x64xf32>
    %1 = vector.multi_reduction <add>, %0, %cst [2] : vector<2x64x49xf32> to vector<2x64xf32>
    %cst_2 = arith.constant 0.0204081628 : f32
    %2 = vector.broadcast %cst_2 : f32 to vector<2x64xf32>
    %3 = arith.mulf %1, %2 : vector<2x64xf32>
    %c0_3 = arith.constant 0 : index
    %c0_4 = arith.constant 0 : index
    %4 = vector.load %arg2[%c0_3, %c0_4] : memref<64x4xf32, #tpu.memory_space<vmem>>, vector<64x4xf32>
    %cst_5 = arith.constant dense<0.000000e+00> : vector<2x4xf32>
    %5 = tpu.matmul %3, %4, %cst_5 {dimension_numbers = #tpu.dot_dimension_numbers<[1], [0], [0], [1], [0, 0, 1, 1], [], []>} : vector<2x64xf32>, vector<64x4xf32>, vector<2x4xf32> -> vector<2x4xf32>
    %cst_6 = arith.constant 0.000000e+00 : f32
    %6 = vector.broadcast %cst_6 : f32 to vector<2x4xf32>
    %7 = arith.maximumf %5, %6 : vector<2x4xf32>
    %c0_7 = arith.constant 0 : index
    %c0_8 = arith.constant 0 : index
    %8 = vector.load %arg3[%c0_7, %c0_8] : memref<4x64xf32, #tpu.memory_space<vmem>>, vector<4x64xf32>
    %cst_9 = arith.constant dense<0.000000e+00> : vector<2x64xf32>
    %9 = tpu.matmul %7, %8, %cst_9 {dimension_numbers = #tpu.dot_dimension_numbers<[1], [0], [0], [1], [0, 0, 1, 1], [], []>} : vector<2x4xf32>, vector<4x64xf32>, vector<2x64xf32> -> vector<2x64xf32>
    %10 = arith.negf %9 : vector<2x64xf32>
    %11 = math.exp %10 : vector<2x64xf32>
    %cst_10 = arith.constant 1.000000e+00 : f32
    %12 = vector.broadcast %cst_10 : f32 to vector<2x64xf32>
    %13 = arith.addf %12, %11 : vector<2x64xf32>
    %14 = arith.divf %12, %13 : vector<2x64xf32>
    %c0_11 = arith.constant 0 : index
    %c0_12 = arith.constant 0 : index
    %c0_13 = arith.constant 0 : index
    %15 = vector.load %arg1[%c0_11, %c0_12, %c0_13] : memref<2x64x49xf32, #tpu.memory_space<vmem>>, vector<2x64x49xf32>
    %16 = vector.shape_cast %14 : vector<2x64xf32> to vector<2x64x1xf32>
    %17 = vector.broadcast %16 : vector<2x64x1xf32> to vector<2x64x49xf32>
    %18 = arith.mulf %15, %17 : vector<2x64x49xf32>
    %c0_14 = arith.constant 0 : index
    %c0_15 = arith.constant 0 : index
    %c0_16 = arith.constant 0 : index
    %19 = vector.load %arg4[%c0_14, %c0_15, %c0_16] : memref<2x64x49xf32, #tpu.memory_space<vmem>>, vector<2x64x49xf32>
    tpu.vector_store %arg4[%c0_14, %c0_15, %c0_16], %18 {strides = array<i32>} : memref<2x64x49xf32, #tpu.memory_space<vmem>>, vector<2x64x49xf32>,
    return
  }
  func.func @transform_0(%arg0: i32) -> (i32, i32, i32) {
    %c0_i32 = arith.constant 0 : i32
    %c0_i32_0 = arith.constant 0 : i32
    %c0_i32_1 = arith.constant 0 : i32
    return %arg0, %c0_i32, %c0_i32_0 : i32, i32, i32
  }
  func.func @transform_1(%arg0: i32) -> (i32, i32) {
    %c0_i32 = arith.constant 0 : i32
    %c0_i32_0 = arith.constant 0 : i32
    %c0_i32_1 = arith.constant 0 : i32
    return %c0_i32, %c0_i32_0 : i32, i32
  }
  func.func @transform_2(%arg0: i32) -> (i32, i32) {
    %c0_i32 = arith.constant 0 : i32
    %c0_i32_0 = arith.constant 0 : i32
    %c0_i32_1 = arith.constant 0 : i32
    return %c0_i32, %c0_i32_0 : i32, i32
  }
  func.func @transform_3(%arg0: i32) -> (i32, i32, i32) {
    %c0_i32 = arith.constant 0 : i32
    %c0_i32_0 = arith.constant 0 : i32
    %c0_i32_1 = arith.constant 0 : i32
    return %arg0, %c0_i32, %c0_i32_0 : i32, i32, i32
  }
}

</mosaic_0001>

<llo_original>
// kernel: tpu_custom_call.1
$region0: #{tpu_custom_call.1}
  #allocation0 [shape = 'u32[]', space=smem, size = 0x4, offset = 0x4, fixed_abs, tag = 'smem constant byte address 0x4 - core index']
  #allocation1 [shape = 'u32[144,128]{1,0:T(1,128)}', space=vmem, size = 0x12000, scoped, tag = 'internal scratch']
  %s0 = inlined_call_operand.vmem [shape: f32[2,64,49], index: 0, kind: input, shape index: {}]
  %s1 = inlined_call_operand.vmem [shape: f32[64,4], index: 1, kind: input, shape index: {}]
  %s2 = inlined_call_operand.vmem [shape: f32[4,64], index: 2, kind: input, shape index: {}]
  %s3 = inlined_call_operand.vmem [shape: f32[2,64,49], index: 3, kind: output, shape index: {}]
  %s4 = sld [smem:[#allocation0]]
  $region22: #{tpu_custom_call.1} parent=0
    _
  %s6 = ssub.s32 1, %s4
  %s7 = scalar_select 0, %s6, %s4
  // Predicated region
  $region2: #{tpu_custom_call.1} parent=0 // pred_check
    _
  $region3: #{tpu_custom_call.1} parent=0 // pred_check_branch
    %9 = sbr.rel (0) target = $region5
  $region4: #{tpu_custom_call.1} parent=0 // pred_region
    _
  $region5: #{tpu_custom_call.1} parent=0 // pred_fallthru
    _
  // Predicated region
  $region6: #{tpu_custom_call.1} parent=0 // pred_check
    _
  $region7: #{tpu_custom_call.1} parent=0 // pred_check_branch
    %11 = sbr.rel (0) target = $region9
  $region8: #{tpu_custom_call.1} parent=0 // pred_region
    _
  $region9: #{tpu_custom_call.1} parent=0 // pred_fallthru
    _
  // Predicated region
  $region10: #{tpu_custom_call.1} parent=0 // pred_check
    _
  $region11: #{tpu_custom_call.1} parent=0 // pred_check_branch
    %13 = sbr.rel (0) target = $region13
  $region12: #{tpu_custom_call.1} parent=0 // pred_region
    _
  $region13: #{tpu_custom_call.1} parent=0 // pred_fallthru
    _
  %v14 = vld [vmem:[%s0] sm:$0xff]
  %v15 = vld [vmem:[%s0 + $0x8] sm:$0xff]
  %v16 = vld [vmem:[%s0 + $0x10] sm:$0xff]
  %v17 = vld [vmem:[%s0 + $0x18] sm:$0xff]
  %v18 = vld [vmem:[%s0 + $0x20] sm:$0xff]
  %v19 = vld [vmem:[%s0 + $0x28] sm:$0xff]
  %v20 = vld [vmem:[%s0 + $0x30] sm:$0xff]
  %v21 = vld [vmem:[%s0 + $0x38] sm:$0xff]
  %v22 = vld [vmem:[%s0 + $0x40] sm:$0xff]
  %v23 = vld [vmem:[%s0 + $0x48] sm:$0xff]
  %v24 = vld [vmem:[%s0 + $0x50] sm:$0xff]
  %v25 = vld [vmem:[%s0 + $0x58] sm:$0xff]
  %v26 = vld [vmem:[%s0 + $0x60] sm:$0xff]
  %v27 = vld [vmem:[%s0 + $0x68] sm:$0xff]
  %v28 = vld [vmem:[%s0 + $0x70] sm:$0xff]
  %v29 = vld [vmem:[%s0 + $0x78] sm:$0xff]
  %vm30 = vcmask 400384
  %v31 = vsel %vm30, %v14, 0.0
  %32 = vadd.xlane.f32.xlu0 %v31
  %v33 = vpop.xlane.xlu0 %32
  %v34 = vsel %vm30, %v15, 0.0
  %35 = vadd.xlane.f32.xlu0 %v34
  %v36 = vpop.xlane.xlu0 %35
  %v37 = vsel %vm30, %v16, 0.0
  %38 = vadd.xlane.f32.xlu0 %v37
  %v39 = vpop.xlane.xlu0 %38
  %v40 = vsel %vm30, %v17, 0.0
  %41 = vadd.xlane.f32.xlu0 %v40
  %v42 = vpop.xlane.xlu0 %41
  %v43 = vsel %vm30, %v18, 0.0
  %44 = vadd.xlane.f32.xlu0 %v43
  %v45 = vpop.xlane.xlu0 %44
  %v46 = vsel %vm30, %v19, 0.0
  %47 = vadd.xlane.f32.xlu0 %v46
  %v48 = vpop.xlane.xlu0 %47
  %v49 = vsel %vm30, %v20, 0.0
  %50 = vadd.xlane.f32.xlu0 %v49
  %v51 = vpop.xlane.xlu0 %50
  %v52 = vsel %vm30, %v21, 0.0
  %53 = vadd.xlane.f32.xlu0 %v52
  %v54 = vpop.xlane.xlu0 %53
  %v55 = vsel %vm30, %v22, 0.0
  %56 = vadd.xlane.f32.xlu0 %v55
  %v57 = vpop.xlane.xlu0 %56
  %v58 = vsel %vm30, %v23, 0.0
  %59 = vadd.xlane.f32.xlu0 %v58
  %v60 = vpop.xlane.xlu0 %59
  %v61 = vsel %vm30, %v24, 0.0
  %62 = vadd.xlane.f32.xlu0 %v61
  %v63 = vpop.xlane.xlu0 %62
  %v64 = vsel %vm30, %v25, 0.0
  %65 = vadd.xlane.f32.xlu0 %v64
  %v66 = vpop.xlane.xlu0 %65
  %v67 = vsel %vm30, %v26, 0.0
  %68 = vadd.xlane.f32.xlu0 %v67
  %v69 = vpop.xlane.xlu0 %68
  %v70 = vsel %vm30, %v27, 0.0
  %71 = vadd.xlane.f32.xlu0 %v70
  %v72 = vpop.xlane.xlu0 %71
  %v73 = vsel %vm30, %v28, 0.0
  %74 = vadd.xlane.f32.xlu0 %v73
  %v75 = vpop.xlane.xlu0 %74
  %v76 = vsel %vm30, %v29, 0.0
  %77 = vadd.xlane.f32.xlu0 %v76
  %v78 = vpop.xlane.xlu0 %77
  %v79 = vmul.f32 %v33, 0.020408163
  %v80 = vmul.f32 %v36, 0.020408163
  %v81 = vmul.f32 %v39, 0.020408163
  %v82 = vmul.f32 %v42, 0.020408163
  %v83 = vmul.f32 %v45, 0.020408163
  %v84 = vmul.f32 %v48, 0.020408163
  %v85 = vmul.f32 %v51, 0.020408163
  %v86 = vmul.f32 %v54, 0.020408163
  %v87 = vmul.f32 %v57, 0.020408163
  %v88 = vmul.f32 %v60, 0.020408163
  %v89 = vmul.f32 %v63, 0.020408163
  %v90 = vmul.f32 %v66, 0.020408163
  %v91 = vmul.f32 %v69, 0.020408163
  %v92 = vmul.f32 %v72, 0.020408163
  %v93 = vmul.f32 %v75, 0.020408163
  %v94 = vmul.f32 %v78, 0.020408163
  %v95 = vld [vmem:[%s1] sm:$0xff]
  %v96 = vld [vmem:[%s1 + $0x8] sm:$0xff]
  %v97 = vld [vmem:[%s1 + $0x10] sm:$0xff]
  %v98 = vld [vmem:[%s1 + $0x18] sm:$0xff]
  %v99 = vld [vmem:[%s1 + $0x20] sm:$0xff]
  %v100 = vld [vmem:[%s1 + $0x28] sm:$0xff]
  %v101 = vld [vmem:[%s1 + $0x30] sm:$0xff]
  %v102 = vld [vmem:[%s1 + $0x38] sm:$0xff]
  %v119 = vlaneseq
  %v120 = vand.u32 %v119, 127
  %v121 = vlaneseq
  %v122 = vshrl.u32 %v121, 7
  %v123 = vsub.s32 %v120, %v122
  %v124 = vrot.slane %v79, %v123
  %v125 = vadd.s32 %v120, 4294967288
  %v126 = vlaneseq
  %v127 = vshrl.u32 %v126, 7
  %v128 = vsub.s32 %v125, %v127
  %v129 = vrot.slane %v80, %v128
  %vm130 = vcmask 130112
  %v131 = vsel %vm130, %v129, %v124
  %v132 = vadd.s32 %v120, 4294967280
  %v133 = vlaneseq
  %v134 = vshrl.u32 %v133, 7
  %v135 = vsub.s32 %v132, %v134
  %v136 = vrot.slane %v81, %v135
  %vm137 = vcmask 195712
  %v138 = vsel %vm137, %v136, %v131
  %v139 = vadd.s32 %v120, 4294967272
  %v140 = vlaneseq
  %v141 = vshrl.u32 %v140, 7
  %v142 = vsub.s32 %v139, %v141
  %v143 = vrot.slane %v82, %v142
  %vm144 = vcmask 261312
  %v145 = vsel %vm144, %v143, %v138
  %v146 = vadd.s32 %v120, 4294967264
  %v147 = vlaneseq
  %v148 = vshrl.u32 %v147, 7
  %v149 = vsub.s32 %v146, %v148
  %v150 = vrot.slane %v83, %v149
  %vm151 = vcmask 326912
  %v152 = vsel %vm151, %v150, %v145
  %v153 = vadd.s32 %v120, 4294967256
  %v154 = vlaneseq
  %v155 = vshrl.u32 %v154, 7
  %v156 = vsub.s32 %v153, %v155
  %v157 = vrot.slane %v84, %v156
  %vm158 = vcmask 392512
  %v159 = vsel %vm158, %v157, %v152
  %v160 = vadd.s32 %v120, 4294967248
  %v161 = vlaneseq
  %v162 = vshrl.u32 %v161, 7
  %v163 = vsub.s32 %v160, %v162
  %v164 = vrot.slane %v85, %v163
  %vm165 = vcmask 458112
  %v166 = vsel %vm165, %v164, %v159
  %v167 = vadd.s32 %v120, 4294967240
  %v168 = vlaneseq
  %v169 = vshrl.u32 %v168, 7
  %v170 = vsub.s32 %v167, %v169
  %v171 = vrot.slane %v86, %v170
  %vm172 = vcmask 523712
  %v173 = vsel %vm172, %v171, %v166
  %v174 = vlaneseq
  %v175 = vshrl.u32 %v174, 7
  %v176 = vsub.s32 %v120, %v175
  %v177 = vrot.slane %v87, %v176
  %v178 = vlaneseq
  %v179 = vshrl.u32 %v178, 7
  %v180 = vsub.s32 %v125, %v179
  %v181 = vrot.slane %v88, %v180
  %v182 = vsel %vm130, %v181, %v177
  %v183 = vlaneseq
  %v184 = vshrl.u32 %v183, 7
  %v185 = vsub.s32 %v132, %v184
  %v186 = vrot.slane %v89, %v185
  %v187 = vsel %vm137, %v186, %v182
  %v188 = vlaneseq
  %v189 = vshrl.u32 %v188, 7
  %v190 = vsub.s32 %v139, %v189
  %v191 = vrot.slane %v90, %v190
  %v192 = vsel %vm144, %v191, %v187
  %v193 = vlaneseq
  %v194 = vshrl.u32 %v193, 7
  %v195 = vsub.s32 %v146, %v194
  %v196 = vrot.slane %v91, %v195
  %v197 = vsel %vm151, %v196, %v192
  %v198 = vlaneseq
  %v199 = vshrl.u32 %v198, 7
  %v200 = vsub.s32 %v153, %v199
  %v201 = vrot.slane %v92, %v200
  %v202 = vsel %vm158, %v201, %v197
  %v203 = vlaneseq
  %v204 = vshrl.u32 %v203, 7
  %v205 = vsub.s32 %v160, %v204
  %v206 = vrot.slane %v93, %v205
  %v207 = vsel %vm165, %v206, %v202
  %v208 = vlaneseq
  %v209 = vshrl.u32 %v208, 7
  %v210 = vsub.s32 %v167, %v209
  %v211 = vrot.slane %v94, %v210
  %v212 = vsel %vm172, %v211, %v207
  %vm213 = vcmask 1041409
  %v214 = vsel %vm213, %v212, %v173
  %vm215 = vcmask 523264
  %v216 = vsel %vm215, %v214, 0
  %218 = vmatprep.subr.mxu0 0.0
  %219 = vmatpush1.msra.mxu0 %v95
  %220 = vmatprep.subr.mxu0 0.0
  %221 = vmatpush1.msra.mxu0 %v96
  %222 = vmatprep.subr.mxu0 0.0
  %223 = vmatpush1.msra.mxu0 %v97
  %224 = vmatprep.subr.mxu0 0.0
  %225 = vmatpush1.msra.mxu0 %v98
  %226 = vmatprep.subr.mxu0 0.0
  %227 = vmatpush1.msra.mxu0 %v99
  %228 = vmatprep.subr.mxu0 0.0
  %229 = vmatpush1.msra.mxu0 %v100
  %230 = vmatprep.subr.mxu0 0.0
  %231 = vmatpush1.msra.mxu0 %v101
  %232 = vmatprep.subr.mxu0 0.0
  %233 = vmatpush1.msra.mxu0 %v102
  %234 = vmatprep.subr.mxu0 0.0
  %235 = vmatpush1.msra.mxu0 0.0
  %236 = vmatprep.subr.mxu0 0.0
  %237 = vmatpush1.msra.mxu0 0.0
  %238 = vmatprep.subr.mxu0 0.0
  %239 = vmatpush1.msra.mxu0 0.0
  %240 = vmatprep.subr.mxu0 0.0
  %241 = vmatpush1.msra.mxu0 0.0
  %242 = vmatprep.subr.mxu0 0.0
  %243 = vmatpush1.msra.mxu0 0.0
  %244 = vmatprep.subr.mxu0 0.0
  %245 = vmatpush1.msra.mxu0 0.0
  %246 = vmatprep.subr.mxu0 0.0
  %247 = vmatpush1.msra.mxu0 0.0
  %248 = vmatprep.subr.mxu0 0.0
  %249 = vmatpush1.msra.mxu0 0.0
  %250 = vmatprep.subr.mxu0 0.0
  %251 = vmatpush1.msra.mxu0 0.0
  %252 = vmatprep.subr.mxu0 0.0
  %253 = vmatpush1.msra.mxu0 0.0
  %254 = vmatprep.subr.mxu0 0.0
  %255 = vmatpush1.msra.mxu0 0.0
  %256 = vmatprep.subr.mxu0 0.0
  %257 = vmatpush1.msra.mxu0 0.0
  %258 = vmatprep.subr.mxu0 0.0
  %259 = vmatpush1.msra.mxu0 0.0
  %260 = vmatprep.subr.mxu0 0.0
  %261 = vmatpush1.msra.mxu0 0.0
  %262 = vmatprep.subr.mxu0 0.0
  %263 = vmatpush1.msra.mxu0 0.0
  %264 = vmatprep.subr.mxu0 0.0
  %265 = vmatpush1.msra.mxu0 0.0
  %266 = vmatprep.subr.mxu0 0.0
  %267 = vmatpush1.msra.mxu0 0.0
  %268 = vmatprep.subr.mxu0 0.0
  %269 = vmatpush1.msra.mxu0 0.0
  %270 = vmatprep.subr.mxu0 0.0
  %271 = vmatpush1.msra.mxu0 0.0
  %272 = vmatprep.subr.mxu0 0.0
  %273 = vmatpush1.msra.mxu0 0.0
  %274 = vmatprep.subr.mxu0 0.0
  %275 = vmatpush1.msra.mxu0 0.0
  %276 = vmatprep.subr.mxu0 0.0
  %277 = vmatpush1.msra.mxu0 0.0
  %278 = vmatprep.subr.mxu0 0.0
  %279 = vmatpush1.msra.mxu0 0.0
  %280 = vmatprep.subr.mxu0 0.0
  %281 = vmatpush1.msra.mxu0 0.0
  %282 = vmatprep.mubr.f32.mxu0 0.0
  %283 = vmatmul.mubr.f32.gmra.mrb[0].mxu0 %v216
  %v284 = vpop.f32.mrb[0].mxu0
  %v285 = vadd.f32 0.0, %v284
  %v286 = vpop.f32.mrb[0].mxu0
  %287 = vdwg.mxu0
  %v288 = vmax.f32 %v285, 0.0
  %v289 = vld [vmem:[%s2] sm:$0xf]
  %vm290 = vcmask 31744
  %v292 = vsel %vm290, %v288, 0
  %vm294 = vcmask 1043456
  %v296 = vsel %vm294, %v289, 0
  %298 = vmatprep.subr.mxu0 0.0
  %299 = vmatpush1.msra.mxu0 %v296
  %300 = vmatprep.subr.mxu0 0.0
  %301 = vmatpush1.msra.mxu0 0.0
  %302 = vmatprep.subr.mxu0 0.0
  %303 = vmatpush1.msra.mxu0 0.0
  %304 = vmatprep.subr.mxu0 0.0
  %305 = vmatpush1.msra.mxu0 0.0
  %306 = vmatprep.subr.mxu0 0.0
  %307 = vmatpush1.msra.mxu0 0.0
  %308 = vmatprep.subr.mxu0 0.0
  %309 = vmatpush1.msra.mxu0 0.0
  %310 = vmatprep.subr.mxu0 0.0
  %311 = vmatpush1.msra.mxu0 0.0
  %312 = vmatprep.subr.mxu0 0.0
  %313 = vmatpush1.msra.mxu0 0.0
  %314 = vmatprep.subr.mxu0 0.0
  %315 = vmatpush1.msra.mxu0 0.0
  %316 = vmatprep.subr.mxu0 0.0
  %317 = vmatpush1.msra.mxu0 0.0
  %318 = vmatprep.subr.mxu0 0.0
  %319 = vmatpush1.msra.mxu0 0.0
  %320 = vmatprep.subr.mxu0 0.0
  %321 = vmatpush1.msra.mxu0 0.0
  %322 = vmatprep.subr.mxu0 0.0
  %323 = vmatpush1.msra.mxu0 0.0
  %324 = vmatprep.subr.mxu0 0.0
  %325 = vmatpush1.msra.mxu0 0.0
  %326 = vmatprep.subr.mxu0 0.0
  %327 = vmatpush1.msra.mxu0 0.0
  %328 = vmatprep.subr.mxu0 0.0
  %329 = vmatpush1.msra.mxu0 0.0
  %330 = vmatprep.subr.mxu0 0.0
  %331 = vmatpush1.msra.mxu0 0.0
  %332 = vmatprep.subr.mxu0 0.0
  %333 = vmatpush1.msra.mxu0 0.0
  %334 = vmatprep.subr.mxu0 0.0
  %335 = vmatpush1.msra.mxu0 0.0
  %336 = vmatprep.subr.mxu0 0.0
  %337 = vmatpush1.msra.mxu0 0.0
  %338 = vmatprep.subr.mxu0 0.0
  %339 = vmatpush1.msra.mxu0 0.0
  %340 = vmatprep.subr.mxu0 0.0
  %341 = vmatpush1.msra.mxu0 0.0
  %342 = vmatprep.subr.mxu0 0.0
  %343 = vmatpush1.msra.mxu0 0.0
  %344 = vmatprep.subr.mxu0 0.0
  %345 = vmatpush1.msra.mxu0 0.0
  %346 = vmatprep.subr.mxu0 0.0
  %347 = vmatpush1.msra.mxu0 0.0
  %348 = vmatprep.subr.mxu0 0.0
  %349 = vmatpush1.msra.mxu0 0.0
  %350 = vmatprep.subr.mxu0 0.0
  %351 = vmatpush1.msra.mxu0 0.0
  %352 = vmatprep.subr.mxu0 0.0
  %353 = vmatpush1.msra.mxu0 0.0
  %354 = vmatprep.subr.mxu0 0.0
  %355 = vmatpush1.msra.mxu0 0.0
  %356 = vmatprep.subr.mxu0 0.0
  %357 = vmatpush1.msra.mxu0 0.0
  %358 = vmatprep.subr.mxu0 0.0
  %359 = vmatpush1.msra.mxu0 0.0
  %360 = vmatprep.subr.mxu0 0.0
  %361 = vmatpush1.msra.mxu0 0.0
  %362 = vmatprep.mubr.f32.mxu0 0.0
  %363 = vmatmul.mubr.f32.gmra.mrb[0].mxu0 %v292
  %v364 = vpop.f32.mrb[0].mxu0
  %v365 = vadd.f32 0.0, %v364
  %v366 = vpop.f32.mrb[0].mxu0
  %367 = vdwg.mxu0
  %v368 = vxor.u32 %v365, 2147483648
  %v369 = vmul.f32 %v368, 1.442695
  %v370 = vpow.pop %v369
  %v371 = vadd.f32 %v370, 1.0
  %v372 = vrcp.pop %v371
  %v373 = vmul.f32 1.0, %v372
  %v374 = vlaneseq
  %v375 = vshrl.u32 %v374, 7
  %v376 = vsub.s32 0, %v375
  %v377 = vrot.slane %v373, %v376
  %379 = vbcast.lane.b32.xlu0 %v377, 256
  %v380 = vpop.permute.xlu0 %379
  %s382 = sor.u32 256, 8
  %383 = vbcast.lane.b32.xlu0 %v377, %s382
  %v384 = vpop.permute.xlu0 %383
  %s386 = sor.u32 256, 16
  %387 = vbcast.lane.b32.xlu0 %v377, %s386
  %v388 = vpop.permute.xlu0 %387
  %s390 = sor.u32 256, 24
  %391 = vbcast.lane.b32.xlu0 %v377, %s390
  %v392 = vpop.permute.xlu0 %391
  %s394 = sor.u32 256, 32
  %395 = vbcast.lane.b32.xlu0 %v377, %s394
  %v396 = vpop.permute.xlu0 %395
  %s398 = sor.u32 256, 40
  %399 = vbcast.lane.b32.xlu0 %v377, %s398
  %v400 = vpop.permute.xlu0 %399
  %s402 = sor.u32 256, 48
  %403 = vbcast.lane.b32.xlu0 %v377, %s402
  %v404 = vpop.permute.xlu0 %403
  %s406 = sor.u32 256, 56
  %407 = vbcast.lane.b32.xlu0 %v377, %s406
  %v408 = vpop.permute.xlu0 %407
  %v409 = vlaneseq
  %v410 = vshrl.u32 %v409, 7
  %v411 = vsub.s32 1, %v410
  %v412 = vrot.slane %v373, %v411
  %414 = vbcast.lane.b32.xlu0 %v412, 256
  %v415 = vpop.permute.xlu0 %414
  %s417 = sor.u32 256, 8
  %418 = vbcast.lane.b32.xlu0 %v412, %s417
  %v419 = vpop.permute.xlu0 %418
  %s421 = sor.u32 256, 16
  %422 = vbcast.lane.b32.xlu0 %v412, %s421
  %v423 = vpop.permute.xlu0 %422
  %s425 = sor.u32 256, 24
  %426 = vbcast.lane.b32.xlu0 %v412, %s425
  %v427 = vpop.permute.xlu0 %426
  %s429 = sor.u32 256, 32
  %430 = vbcast.lane.b32.xlu0 %v412, %s429
  %v431 = vpop.permute.xlu0 %430
  %s433 = sor.u32 256, 40
  %434 = vbcast.lane.b32.xlu0 %v412, %s433
  %v435 = vpop.permute.xlu0 %434
  %s437 = sor.u32 256, 48
  %438 = vbcast.lane.b32.xlu0 %v412, %s437
  %v439 = vpop.permute.xlu0 %438
  %s441 = sor.u32 256, 56
  %442 = vbcast.lane.b32.xlu0 %v412, %s441
  %v443 = vpop.permute.xlu0 %442
  %v444 = vmul.f32 %v14, %v380
  %v445 = vmul.f32 %v15, %v384
  %v446 = vmul.f32 %v16, %v388
  %v447 = vmul.f32 %v17, %v392
  %v448 = vmul.f32 %v18, %v396
  %v449 = vmul.f32 %v19, %v400
  %v450 = vmul.f32 %v20, %v404
  %v451 = vmul.f32 %v21, %v408
  %v452 = vmul.f32 %v22, %v415
  %v453 = vmul.f32 %v23, %v419
  %v454 = vmul.f32 %v24, %v423
  %v455 = vmul.f32 %v25, %v427
  %v456 = vmul.f32 %v26, %v431
  %v457 = vmul.f32 %v27, %v435
  %v458 = vmul.f32 %v28, %v439
  %v459 = vmul.f32 %v29, %v443
  %460 = vst.msk [vmem:[%s3] sm:$0xff] %vm30, %v444
  %461 = vst.msk [vmem:[%s3 + $0x8] sm:$0xff] %vm30, %v445
  %462 = vst.msk [vmem:[%s3 + $0x10] sm:$0xff] %vm30, %v446
  %463 = vst.msk [vmem:[%s3 + $0x18] sm:$0xff] %vm30, %v447
  %464 = vst.msk [vmem:[%s3 + $0x20] sm:$0xff] %vm30, %v448
  %465 = vst.msk [vmem:[%s3 + $0x28] sm:$0xff] %vm30, %v449
  %466 = vst.msk [vmem:[%s3 + $0x30] sm:$0xff] %vm30, %v450
  %467 = vst.msk [vmem:[%s3 + $0x38] sm:$0xff] %vm30, %v451
  %468 = vst.msk [vmem:[%s3 + $0x40] sm:$0xff] %vm30, %v452
  %469 = vst.msk [vmem:[%s3 + $0x48] sm:$0xff] %vm30, %v453
  %470 = vst.msk [vmem:[%s3 + $0x50] sm:$0xff] %vm30, %v454
  %471 = vst.msk [vmem:[%s3 + $0x58] sm:$0xff] %vm30, %v455
  %472 = vst.msk [vmem:[%s3 + $0x60] sm:$0xff] %vm30, %v456
  %473 = vst.msk [vmem:[%s3 + $0x68] sm:$0xff] %vm30, %v457
  %474 = vst.msk [vmem:[%s3 + $0x70] sm:$0xff] %vm30, %v458
  %475 = vst.msk [vmem:[%s3 + $0x78] sm:$0xff] %vm30, %v459
  // Predicated region
  $region14: #{tpu_custom_call.1} parent=0 // pred_check
    _
  $region15: #{tpu_custom_call.1} parent=0 // pred_check_branch
    %477 = sbr.rel (0) target = $region17
  $region16: #{tpu_custom_call.1} parent=0 // pred_region
    _
  $region17: #{tpu_custom_call.1} parent=0 // pred_fallthru
    _
  // Predicated region
  $region18: #{tpu_custom_call.1} parent=0 // pred_check
    _
  $region19: #{tpu_custom_call.1} parent=0 // pred_check_branch
    %479 = sbr.rel (0) target = $region21
  $region20: #{tpu_custom_call.1} parent=0 // pred_region
    _
  $region21: #{tpu_custom_call.1} parent=0 // pred_fallthru
    _

</llo_original>
